<compile_context>
chip_gen: v7x
topology: tpu7x:2x2x1
jax: 0.10.0
libtpu: 0.0.40
codegen_flags: <defaults>
</compile_context>

<pallas_src>
import jax
import jax.numpy as jnp
from jax.experimental import pallas as pl
from jax.experimental.pallas import tpu as pltpu

BITS = 48

IMAGENET_MEAN = (0.485, 0.456, 0.406)
IMAGENET_STD = (0.229, 0.224, 0.225)


# ---------------------------------------------------------------------------
# Kernel 1: BCEWithLogits + sum(-1).mean()  ->  scalar loss
# Grid over batch blocks; (1, 1) output block stays resident as the accumulator.
# ---------------------------------------------------------------------------
def message_loss(msg_logits, target_msg):
    B, bits = msg_logits.shape
    # Batch block: full batch for small B (block == full dim is always legal),
    # otherwise a multiple-of-8 tile so the sublane rule holds.
    TB = B if B <= 512 else 256
    n_blocks = pl.cdiv(B, TB)
    inv_B = 1.0 / float(B)
    ragged = (B % TB) != 0

    def kernel(logits_ref, target_ref, out_ref):
        i = pl.program_id(0)

        @pl.when(i == 0)
        def _():
            out_ref[...] = jnp.zeros_like(out_ref)

        x = logits_ref[...].astype(jnp.float32)   # (TB, bits), cast in-register
        y = target_ref[...].astype(jnp.float32)   # (1, bits)  -> broadcasts
        # torch-stable BCEWithLogits: max(x,0) - x*y + log1p(exp(-|x|))
        per_elem = jnp.maximum(x, 0.0) - x * y + jnp.log1p(jnp.exp(-jnp.abs(x)))
        if ragged:  # zero rows past the true batch size in the last block
            row = jax.lax.broadcasted_iota(jnp.int32, per_elem.shape, 0) + i * TB
            per_elem = jnp.where(row < B, per_elem, 0.0)
        out_ref[...] += jnp.sum(per_elem, axis=(0, 1), keepdims=True)

        @pl.when(i == pl.num_programs(0) - 1)
        def _():
            out_ref[...] *= jnp.float32(inv_B)    # .sum(-1).mean() == total / B

    out = pl.pallas_call(
        kernel,
        out_shape=jax.ShapeDtypeStruct((1, 1), jnp.float32),
        grid_spec=pltpu.PrefetchScalarGridSpec(
            num_scalar_prefetch=0,
            grid=(n_blocks,),
            in_specs=[
                pl.BlockSpec((TB, bits), lambda i: (i, 0)),
                pl.BlockSpec((1, bits), lambda i: (0, 0)),
            ],
            out_specs=pl.BlockSpec((1, 1), lambda i: (0, 0)),
        ),
        compiler_params=pltpu.CompilerParams(
            dimension_semantics=("arbitrary",)),   # reduction over batch blocks
    )(msg_logits, target_msg.reshape(1, bits))
    return out[0, 0]


# ---------------------------------------------------------------------------
# Kernel 2 (NOT on the loss path): img*0.5+0.5 then per-channel normalization.
# Dead code w.r.t. the loss returned by MessageLoss.forward; kept as a
# standalone, properly tiled kernel instead of being silently DCE'd.
# TODO(synk): normalize_img is undefined upstream; ImageNet mean/std assumed.
# ---------------------------------------------------------------------------
def normalize_img_pallas(img):
    N, C, H, W = img.shape
    assert C == 3, "ImageNet normalization assumes 3 channels"
    HW = H * W
    x3 = img.reshape(N, C, HW)                    # metadata-only reshape of NCHW

    TILE = 512 if HW >= 512 else HW               # multiple of 128, or full dim
    n_cols = pl.cdiv(HW, TILE)

    m0, m1, m2 = IMAGENET_MEAN
    s0, s1, s2 = (1.0 / s for s in IMAGENET_STD)

    def kernel(x_ref, o_ref):
        x = x_ref[0].astype(jnp.float32) * 0.5 + 0.5          # (C, TILE), [-1,1]->[0,1]
        ch = jax.lax.broadcasted_iota(jnp.int32, x.shape, 0)   # channel id per row
        mean = jnp.where(ch == 0, m0, jnp.where(ch == 1, m1, m2))
        inv_std = jnp.where(ch == 0, s0, jnp.where(ch == 1, s1, s2))
        o_ref[0] = ((x - mean) * inv_std).astype(o_ref.dtype)

    out = pl.pallas_call(
        kernel,
        out_shape=jax.ShapeDtypeStruct((N, C, HW), img.dtype),  # keep input dtype
        grid_spec=pltpu.PrefetchScalarGridSpec(
            num_scalar_prefetch=0,
            grid=(N, n_cols),
            in_specs=[pl.BlockSpec((1, C, TILE), lambda n, j: (n, 0, j))],
            out_specs=pl.BlockSpec((1, C, TILE), lambda n, j: (n, 0, j)),
        ),
        compiler_params=pltpu.CompilerParams(
            dimension_semantics=("parallel", "parallel")),  # v7x: shard over 2 TCs
    )(x3)
    return out.reshape(N, C, H, W)


# ---------------------------------------------------------------------------
# MessageLoss.forward equivalent (returns only the loss, as the module does).
# ---------------------------------------------------------------------------
def message_loss_forward(img, msg_logits, target_msg):
    # img*0.5+0.5 and normalize_img(img) do not feed the returned loss; they are
    # intentionally not executed here (XLA would DCE them anyway).  Call
    # normalize_img_pallas(img) explicitly if the normalized image is needed.
    del img
    return message_loss(msg_logits, target_msg)


if __name__ == "__main__":
    key = jax.random.PRNGKey(0)
    k_img, k_logits, k_msg = jax.random.split(key, 3)

    # Small shapes consistent with the module: RGB image + (B, 48) bit logits.
    img = jax.random.uniform(k_img, (2, 3, 16, 16), jnp.float32, -1.0, 1.0)  # NCHW
    msg_logits = jax.random.normal(k_logits, (2, BITS), jnp.float32)
    # set_target_message(bits=48): (randn(48) > 0).float()
    target_msg = (jax.random.normal(k_msg, (BITS,)) > 0).astype(jnp.float32)

    loss = jax.block_until_ready(message_loss_forward(img, msg_logits, target_msg))

    # Reference: BCEWithLogitsLoss(reduction='none')(logits, target[None]).sum(-1).mean()
    x, y = msg_logits, target_msg[None]
    ref = jnp.mean(
        jnp.sum(jnp.maximum(x, 0.0) - x * y + jnp.log1p(jnp.exp(-jnp.abs(x))), axis=-1)
    )
    assert jnp.allclose(loss, ref, rtol=1e-5, atol=1e-5), (loss, ref)

    # Standalone check of the (dead-w.r.t.-loss) normalize kernel.
    norm = jax.block_until_ready(normalize_img_pallas(img))
    mean = jnp.array(IMAGENET_MEAN, jnp.float32).reshape(1, 3, 1, 1)
    std = jnp.array(IMAGENET_STD, jnp.float32).reshape(1, 3, 1, 1)
    norm_ref = ((img * 0.5 + 0.5) - mean) / std
    assert jnp.allclose(norm, norm_ref, rtol=1e-5, atol=1e-5)

    print("KERNEL_OK")
</pallas_src>

<mosaic_0001>
module attributes {stable_mosaic.version = 11 : i64} {
  func.func @kernel(%arg0: i32, %arg1: memref<2x48xf32, #tpu.memory_space<vmem>>, %arg2: memref<1x48xf32, #tpu.memory_space<vmem>>, %arg3: memref<1x1xf32, #tpu.memory_space<vmem>>) attributes {dimension_semantics = [#tpu.dimension_semantics<arbitrary>], iteration_bounds = array<i64: 1>, scalar_prefetch = 0 : i64, scratch_operands = 0 : i64, tpu.core_type = #tpu.core_type<tc>, window_params = [{transform_indices = @transform_0, window_bounds = array<i64: 2, 48>}, {pipeline_mode = #tpu.pipeline_mode<synchronous>, transform_indices = @transform_1, window_bounds = array<i64: 1, 48>}, {pipeline_mode = #tpu.pipeline_mode<synchronous>, transform_indices = @transform_2, window_bounds = array<i64: 1, 1>}]} {
    %c0_i32 = arith.constant 0 : i32
    %0 = arith.cmpi eq, %arg0, %c0_i32 : i32
    %1 = arith.extui %0 : i1 to i32
    %c0_i32_0 = arith.constant 0 : i32
    %2 = arith.cmpi ne, %1, %c0_i32_0 : i32
    scf.if %2 {
      %cst_12 = arith.constant 0.000000e+00 : f32
      %27 = vector.broadcast %cst_12 : f32 to vector<1x1xf32>
      %c0_13 = arith.constant 0 : index
      %c0_14 = arith.constant 0 : index
      %28 = vector.load %arg3[%c0_13, %c0_14] : memref<1x1xf32, #tpu.memory_space<vmem>>, vector<1x1xf32>
      tpu.vector_store %arg3[%c0_13, %c0_14], %27 {strides = array<i32>} : memref<1x1xf32, #tpu.memory_space<vmem>>, vector<1x1xf32>,
    } else {
    }
    %c0 = arith.constant 0 : index
    %c0_1 = arith.constant 0 : index
    %3 = vector.load %arg1[%c0, %c0_1] : memref<2x48xf32, #tpu.memory_space<vmem>>, vector<2x48xf32>
    %c0_2 = arith.constant 0 : index
    %c0_3 = arith.constant 0 : index
    %4 = vector.load %arg2[%c0_2, %c0_3] : memref<1x48xf32, #tpu.memory_space<vmem>>, vector<1x48xf32>
    %cst = arith.constant 0.000000e+00 : f32
    %5 = vector.broadcast %cst : f32 to vector<2x48xf32>
    %6 = arith.maximumf %3, %5 : vector<2x48xf32>
    %7 = vector.broadcast %4 : vector<1x48xf32> to vector<2x48xf32>
    %8 = arith.mulf %3, %7 : vector<2x48xf32>
    %9 = arith.subf %6, %8 : vector<2x48xf32>
    %10 = math.absf %3 : vector<2x48xf32>
    %cst_4 = arith.constant 0.000000e+00 : f32
    %11 = vector.broadcast %cst_4 : f32 to vector<2x48xf32>
    %12 = arith.subf %11, %10 : vector<2x48xf32>
    %13 = math.exp %12 : vector<2x48xf32>
    %14 = math.log1p %13 : vector<2x48xf32>
    %15 = arith.addf %9, %14 : vector<2x48xf32>
    %c0_5 = arith.constant 0 : index
    %c0_6 = arith.constant 0 : index
    %16 = vector.load %arg3[%c0_5, %c0_6] : memref<1x1xf32, #tpu.memory_space<vmem>>, vector<1x1xf32>
    %17 = vector.shape_cast %15 : vector<2x48xf32> to vector<1x2x48xf32>
    %cst_7 = arith.constant dense<0.000000e+00> : vector<1xf32>
    %18 = vector.multi_reduction <add>, %17, %cst_7 [1, 2] : vector<1x2x48xf32> to vector<1xf32>
    %19 = vector.shape_cast %18 : vector<1xf32> to vector<1x1x1xf32>
    %20 = vector.extract %19[0, 0, 0] : f32 from vector<1x1x1xf32>
    %21 = vector.broadcast %20 : f32 to vector<1x1xf32>
    %22 = arith.addf %16, %21 : vector<1x1xf32>
    %c0_8 = arith.constant 0 : index
    %c0_9 = arith.constant 0 : index
    %23 = vector.load %arg3[%c0_8, %c0_9] : memref<1x1xf32, #tpu.memory_space<vmem>>, vector<1x1xf32>
    tpu.vector_store %arg3[%c0_8, %c0_9], %22 {strides = array<i32>} : memref<1x1xf32, #tpu.memory_space<vmem>>, vector<1x1xf32>,
    %c0_i32_10 = arith.constant 0 : i32
    %24 = arith.cmpi eq, %arg0, %c0_i32_10 : i32
    %25 = arith.extui %24 : i1 to i32
    %c0_i32_11 = arith.constant 0 : i32
    %26 = arith.cmpi ne, %25, %c0_i32_11 : i32
    scf.if %26 {
      %c0_12 = arith.constant 0 : index
      %c0_13 = arith.constant 0 : index
      %27 = vector.load %arg3[%c0_12, %c0_13] : memref<1x1xf32, #tpu.memory_space<vmem>>, vector<1x1xf32>
      %cst_14 = arith.constant 5.000000e-01 : f32
      %28 = vector.broadcast %cst_14 : f32 to vector<1x1xf32>
      %29 = arith.mulf %27, %28 : vector<1x1xf32>
      %c0_15 = arith.constant 0 : index
      %c0_16 = arith.constant 0 : index
      %30 = vector.load %arg3[%c0_15, %c0_16] : memref<1x1xf32, #tpu.memory_space<vmem>>, vector<1x1xf32>
      tpu.vector_store %arg3[%c0_15, %c0_16], %29 {strides = array<i32>} : memref<1x1xf32, #tpu.memory_space<vmem>>, vector<1x1xf32>,
    } else {
    }
    return
  }
  func.func @transform_0(%arg0: i32) -> (i32, i32) {
    %c0_i32 = arith.constant 0 : i32
    %c0_i32_0 = arith.constant 0 : i32
    return %arg0, %c0_i32 : i32, i32
  }
  func.func @transform_1(%arg0: i32) -> (i32, i32) {
    %c0_i32 = arith.constant 0 : i32
    %c0_i32_0 = arith.constant 0 : i32
    %c0_i32_1 = arith.constant 0 : i32
    return %c0_i32, %c0_i32_0 : i32, i32
  }
  func.func @transform_2(%arg0: i32) -> (i32, i32) {
    %c0_i32 = arith.constant 0 : i32
    %c0_i32_0 = arith.constant 0 : i32
    %c0_i32_1 = arith.constant 0 : i32
    return %c0_i32, %c0_i32_0 : i32, i32
  }
}

</mosaic_0001>

<llo_original>
// kernel: tpu_custom_call.1
$region0: #{tpu_custom_call.1}
  #allocation0 [shape = 'u32[]', space=smem, size = 0x4, offset = 0x4, fixed_abs, tag = 'smem constant byte address 0x4 - core index']
  #allocation1 [shape = 'u32[144,128]{1,0:T(1,128)}', space=vmem, size = 0x12000, scoped, tag = 'internal scratch']
  %s0 = inlined_call_operand.hbm [shape: f32[2,48], index: 0, kind: input, shape index: {}]
  %s1 = inlined_call_operand.vmem [shape: f32[1,48], index: 1, kind: input, shape index: {}]
  %s2 = inlined_call_operand.hbm [shape: f32[1,1], index: 2, kind: output, shape index: {}]
  %s3 = sld [smem:[#allocation0]]
  $region30: #{tpu_custom_call.1} parent=0
    _
  %s5 = ssub.s32 1, %s3
  %s6 = scalar_select 0, %s5, %s3
  $region1: #{tpu_custom_call.1} parent=0
    #allocation2 [shape = 'u8[1024]{0}', space=vmem, size = 0x400, scoped, tag = 'input window, operand 0, single buffered']
    #allocation3 [shape = 's32[1]{0}', space=sflag, size = 0x4, scoped, tag = 'scoped memory for tpu_custom_call.1']
    #allocation4 [shape = 's32[1]{0}', space=sflag, size = 0x4, scoped, tag = 'scoped memory for tpu_custom_call.1']
    #allocation5 [shape = 'u8[512]{0}', space=vmem, size = 0x400, scoped, tag = 'output window, operand 0, single buffered']
    %7 = vsyncpa [#allocation3], 0
    %8 = vsyncpa [#allocation4], 0
    // Predicated region
    $region2: #{tpu_custom_call.1} parent=1 // pred_check
      _
    $region3: #{tpu_custom_call.1} parent=1 // pred_check_branch
      %10 = sbr.rel (0) target = $region5
    $region4: #{tpu_custom_call.1} parent=1 // pred_region
      %s12 = ssub.s32 32, 32
      %13 = vsyncadd [#allocation3], %s12
      %s15 = sshll.u32 [#allocation2], 4
      %s16 = int_to_ptr.vmem [resolvable:$true] %s15
      %18 = dma.hbm_to_vmem [thread:$0]  %s0, 32, %s16, [#allocation3]
    $region5: #{tpu_custom_call.1} parent=1 // pred_fallthru
      _
    // Predicated region
    $region6: #{tpu_custom_call.1} parent=1 // pred_check
      _
    $region7: #{tpu_custom_call.1} parent=1 // pred_check_branch
      %20 = sbr.rel (0) target = $region9
    $region8: #{tpu_custom_call.1} parent=1 // pred_region
      _
    $region9: #{tpu_custom_call.1} parent=1 // pred_fallthru
      _
    // Predicated region
    $region10: #{tpu_custom_call.1} parent=1 // pred_check
      _
    $region11: #{tpu_custom_call.1} parent=1 // pred_check_branch
      %22 = sbr.rel (0) target = $region13
    $region12: #{tpu_custom_call.1} parent=1 // pred_region
      %23 = dma.done [#allocation3], 32
    $region13: #{tpu_custom_call.1} parent=1 // pred_fallthru
      _
    %p24 = scmp.eq.s32.totalorder 0, 0
    // Predicated region
    $region14: #{tpu_custom_call.1} parent=1 // pred_check
      %p25 = pneg %p24
    $region15: #{tpu_custom_call.1} parent=1 // pred_check_branch
      %27 = sbr.rel (%p25) target = $region17
    $region16: #{tpu_custom_call.1} parent=1 // pred_region
      %vm28 = vcmask 0
      %29 = vst.msk [vmem:[#allocation5] sm:$0x1] %vm28, 0.0
    $region17: #{tpu_custom_call.1} parent=1 // pred_fallthru
      _
    %v30 = vld [vmem:[#allocation2] sm:$0x3]
    %v31 = vld [vmem:[%s1] sm:$0x1]
    %v32 = vmax.f32 %v30, 0.0
    %v34 = vlaneseq
    %v35 = vshrl.u32 %v34, 7
    %v36 = vsub.s32 0, %v35
    %v37 = vrot.slane %v31, %v36
    %v39 = vmul.f32 %v30, %v37
    %v40 = vsub.f32 %v32, %v39
    %v41 = vand.u32 2147483647, %v30
    %v42 = vsub.f32 0.0, %v41
    %v43 = vmul.f32 %v42, 1.442695
    %v44 = vpow.pop %v43
    %v45 = vadd.f32 %v44, 1.0
    %v46 = vlog2.pop %v45
    %v47 = vmul.f32 %v46, 0.6931472
    %v48 = vmul.f32 -0.5, %v44
    %v49 = vadd.f32 %v48, 1.0
    %v50 = vmul.f32 %v49, %v44
    %v51 = vand.u32 2147483647, %v44
    %vm52 = vcmp.lt.f32.partialorder %v51, 0.0004427343
    %v53 = vsel %vm52, %v50, %v47
    %v54 = vadd.f32 %v40, %v53
    %v55 = vld [vmem:[#allocation5] sm:$0x1]
    %vm56 = vcmask 386048
    %v57 = vsel %vm56, %v54, 0.0
    %58 = vadd.xlane.f32.xlu0 %v57
    %v59 = vpop.xlane.xlu0 %58
    %v60 = vrot.slane %v59, 4
    %v61 = vadd.f32 %v59, %v60
    %v62 = vrot.slane %v61, 2
    %v63 = vadd.f32 %v61, %v62
    %v64 = vrot.slane %v63, 1
    %v65 = vadd.f32 %v63, %v64
    %s66 = vtos %v65
    %v67 = vstv %s66
    %v68 = vadd.f32 %v55, %v67
    %vm69 = vcmask 0
    %70 = vst.msk [vmem:[#allocation5] sm:$0x1] %vm69, %v68
    // Predicated region
    $region18: #{tpu_custom_call.1} parent=1 // pred_check
      %p71 = pneg %p24
    $region19: #{tpu_custom_call.1} parent=1 // pred_check_branch
      %73 = sbr.rel (%p71) target = $region21
    $region20: #{tpu_custom_call.1} parent=1 // pred_region
      %v74 = vld [vmem:[#allocation5] sm:$0x1]
      %v75 = vmul.f32 %v74, 0.5
      %76 = vst.msk [vmem:[#allocation5] sm:$0x1] %vm69, %v75
    $region21: #{tpu_custom_call.1} parent=1 // pred_fallthru
      _
    // Predicated region
    $region22: #{tpu_custom_call.1} parent=1 // pred_check
      _
    $region23: #{tpu_custom_call.1} parent=1 // pred_check_branch
      %78 = sbr.rel (0) target = $region25
    $region24: #{tpu_custom_call.1} parent=1 // pred_region
      %s80 = ssub.s32 16, 16
      %81 = vsyncadd [#allocation4], %s80
      %s83 = sshll.u32 [#allocation5], 4
      %s84 = int_to_ptr.vmem [resolvable:$true] %s83
      %86 = dma.vmem_to_hbm [thread:$0]  %s84, 16, %s2, [#allocation4]
    $region25: #{tpu_custom_call.1} parent=1 // pred_fallthru
      _
    // Predicated region
    $region26: #{tpu_custom_call.1} parent=1 // pred_check
      _
    $region27: #{tpu_custom_call.1} parent=1 // pred_check_branch
      %88 = sbr.rel (0) target = $region29
    $region28: #{tpu_custom_call.1} parent=1 // pred_region
      %89 = dma.done [#allocation4], 16
    $region29: #{tpu_custom_call.1} parent=1 // pred_fallthru
      _
    %90 = vsyncpa [#allocation3], 1
    %91 = vsyncpa [#allocation4], 1

</llo_original>
